<compile_context>
chip_gen: v5e
topology: v5e:2x2
jax: 0.10.0
libtpu: 0.0.40
codegen_flags: <defaults>
</compile_context>

<pallas_src>
import functools

import jax
import jax.numpy as jnp
from jax.experimental import pallas as pl
from jax.experimental.pallas import tpu as pltpu


def _ce_kernel(x_ref, lab_ref, loss_ref, corr_ref, *,
               total_b, tiles_per_core, needs_mask):
    i = pl.program_id(1)

    # Each core-split (grid axis 0) owns its accumulator block; re-init at its first step.
    @pl.when(i == 0)
    def _():
        loss_ref[...] = jnp.zeros_like(loss_ref)
        corr_ref[...] = jnp.zeros_like(corr_ref)

    x = x_ref[...].astype(jnp.float32)          # (tb, C) logits tile
    lab = lab_ref[...]                          # (tb, 1) int32 labels
    tb, C = x.shape

    if needs_mask:
        # Only traced in when padding rows can occur (partial last tile, or a fully
        # padded tile introduced by the 2-way core split with an odd tile count).
        linear_tile = pl.program_id(0) * tiles_per_core + i
        row_ids = linear_tile * tb + jax.lax.broadcasted_iota(jnp.int32, (tb, 1), 0)
        valid = row_ids < total_b                       # (tb, 1) bool
        x = jnp.where(valid, x, 0.0)                    # keep exp/log finite on padding
        lab = jnp.where(valid, lab, -1)                 # padded rows match no class

    # (1, C) class ids, broadcast against (tb, 1) labels — no (tb, C) int32 temporary
    # and no float one-hot materialization.
    class_ids = jax.lax.broadcasted_iota(jnp.int32, (1, C), 1)
    is_label = class_ids == lab                          # (tb, C) bool (broadcast)

    # Numerically stable cross entropy: lse(row) - logit[label].
    row_max = jnp.max(x, axis=1, keepdims=True)                          # (tb, 1)
    sum_exp = jnp.sum(jnp.exp(x - row_max), axis=1, keepdims=True)       # (tb, 1)
    lse = row_max + jnp.log(sum_exp)                                     # (tb, 1)
    tgt = jnp.sum(jnp.where(is_label, x, 0.0), axis=1, keepdims=True)    # (tb, 1)
    per_example = lse - tgt                                              # (tb, 1)

    # top-1: argmax with lowest-index tie-breaking (matches torch.topk / torch.argmax).
    argmax_idx = jnp.min(jnp.where(x == row_max, class_ids, C),
                         axis=1, keepdims=True)                          # (tb, 1)
    correct = (argmax_idx == lab).astype(jnp.float32)                    # (tb, 1)

    if needs_mask:
        per_example = per_example * valid.astype(jnp.float32)
        # `correct` is already 0 on padded rows (lab == -1 there, argmax_idx >= 0).

    loss_ref[...] += jnp.sum(per_example, axis=0, keepdims=True).reshape(1, 1, 1)
    corr_ref[...] += jnp.sum(correct, axis=0, keepdims=True).reshape(1, 1, 1)


def cross_entropy_forward(outputs, label, *, max_block_rows=None):
    """Returns (loss, prec1) matching the PyTorch CrossEntropy.forward."""
    if outputs.ndim == 3 and outputs.shape[1] == 1:
        outputs = outputs.reshape(outputs.shape[0], outputs.shape[2])   # .squeeze(1)
    B, C = outputs.shape
    itemsize = outputs.dtype.itemsize

    # ---- VMEM-budget-driven batch tile --------------------------------------------------
    try:
        vmem_bytes = int(pltpu.get_tpu_info().vmem_capacity_bytes)
    except Exception:                                    # interpret mode / older runtimes
        vmem_bytes = 64 << 20                            # conservative (v7x-sized)
    # Target ~8 MiB logits tiles (double-buffered input ~16 MiB), capped at 1/8 of
    # physical VMEM so the sizing stays safe on v7x (64 MiB) as well as v5e/v6e (128 MiB).
    tile_budget = min(8 << 20, vmem_bytes // 8)
    sub = max(8, 32 // itemsize)                         # sublane multiple: f32/bf16/i8 -> 8/16/32
    tb_cap = max(sub, (tile_budget // (C * itemsize)) // sub * sub)
    if max_block_rows is not None:                       # test/override hook
        tb_cap = min(tb_cap, max(sub, (max_block_rows // sub) * sub))
    tb = B if B <= tb_cap else tb_cap
    num_tiles = pl.cdiv(B, tb)

    # ---- 2-way core split (uses both TensorCores on v7x; harmless on 1-TC chips) --------
    num_splits = 2 if num_tiles > 1 else 1
    tiles_per_core = pl.cdiv(num_tiles, num_splits)
    needs_mask = (num_splits * tiles_per_core * tb) != B

    def in_map(p, i):
        # Clamp so a fully padded tile (odd num_tiles) re-reads the last real tile;
        # its rows are masked out inside the kernel.
        return (jnp.minimum(p * tiles_per_core + i, num_tiles - 1), 0)

    label2d = label.reshape(-1, 1).astype(jnp.int32)
    kernel = functools.partial(_ce_kernel, total_b=B,
                               tiles_per_core=tiles_per_core, needs_mask=needs_mask)

    needed_vmem = 2 * (tb * C * itemsize + tb * 4) + (2 << 20)
    vmem_limit = int(min(vmem_bytes * 3 // 4, max(needed_vmem, 32 << 20)))

    cost = pl.CostEstimate(
        flops=8 * B * C,
        transcendentals=B * C + B,                       # exp per logit + log per row
        bytes_accessed=B * C * itemsize + B * 4 + 8 * num_splits,
    )

    loss_parts, corr_parts = pl.pallas_call(
        kernel,
        out_shape=(jax.ShapeDtypeStruct((num_splits, 1, 1), jnp.float32),
                   jax.ShapeDtypeStruct((num_splits, 1, 1), jnp.float32)),
        grid=(num_splits, tiles_per_core),
        in_specs=[pl.BlockSpec((tb, C), in_map),
                  pl.BlockSpec((tb, 1), in_map)],
        out_specs=(pl.BlockSpec((1, 1, 1), lambda p, i: (p, 0, 0)),
                   pl.BlockSpec((1, 1, 1), lambda p, i: (p, 0, 0))),
        compiler_params=pltpu.CompilerParams(
            dimension_semantics=("parallel", "arbitrary"),
            vmem_limit_bytes=vmem_limit),
        cost_estimate=cost,
    )(outputs, label2d)

    inv_b = 1.0 / B
    return jnp.sum(loss_parts) * inv_b, jnp.sum(corr_parts) * (100.0 * inv_b)


def _reference(outputs, label):
    """Pure-JAX reference mirroring the PyTorch module."""
    x = outputs.reshape(outputs.shape[0], outputs.shape[-1]) if outputs.ndim == 3 else outputs
    logp = jax.nn.log_softmax(x, axis=1)
    loss = -jnp.mean(jnp.take_along_axis(logp, label[:, None], axis=1))
    pred = jnp.argmax(x, axis=1)
    prec1 = jnp.mean((pred == label).astype(jnp.float32)) * 100.0
    return loss, prec1


if __name__ == "__main__":
    key = jax.random.PRNGKey(0)
    ko, kl, ko2, kl2 = jax.random.split(key, 4)

    # Small shape consistent with the module: [B, 1, n_class] logits + [B] labels.
    B, n_class = 8, 256
    outputs = jax.random.normal(ko, (B, 1, n_class), dtype=jnp.float32) * 3.0
    label = jax.random.randint(kl, (B,), 0, n_class, dtype=jnp.int32)

    loss, prec1 = cross_entropy_forward(outputs, label)
    jax.block_until_ready((loss, prec1))
    ref_loss, ref_prec = _reference(outputs, label)
    assert jnp.allclose(loss, ref_loss, atol=1e-4, rtol=1e-4), (loss, ref_loss)
    assert jnp.allclose(prec1, ref_prec, atol=1e-4, rtol=1e-4), (prec1, ref_prec)

    # Second case exercising the multi-tile / core-split / padded-row-mask path.
    B2, n_class2 = 72, 384
    outputs2 = jax.random.normal(ko2, (B2, 1, n_class2), dtype=jnp.float32) * 2.0
    label2 = jax.random.randint(kl2, (B2,), 0, n_class2, dtype=jnp.int32)

    loss2, prec2 = cross_entropy_forward(outputs2, label2, max_block_rows=16)
    jax.block_until_ready((loss2, prec2))
    ref_loss2, ref_prec2 = _reference(outputs2, label2)
    assert jnp.allclose(loss2, ref_loss2, atol=1e-4, rtol=1e-4), (loss2, ref_loss2)
    assert jnp.allclose(prec2, ref_prec2, atol=1e-4, rtol=1e-4), (prec2, ref_prec2)

    print("KERNEL_OK")
</pallas_src>

<mosaic_0001>
module attributes {stable_mosaic.version = 11 : i64} {
  func.func @_ce_kernel(%arg0: i32, %arg1: i32, %arg2: memref<8x256xf32, #tpu.memory_space<vmem>>, %arg3: memref<8x1xi32, #tpu.memory_space<vmem>>, %arg4: memref<1x1x1xf32, #tpu.memory_space<vmem>>, %arg5: memref<1x1x1xf32, #tpu.memory_space<vmem>>) attributes {dimension_semantics = [#tpu.dimension_semantics<parallel>, #tpu.dimension_semantics<arbitrary>], iteration_bounds = array<i64: 1, 1>, scalar_prefetch = 0 : i64, scratch_operands = 0 : i64, tpu.core_type = #tpu.core_type<tc>, window_params = [{transform_indices = @transform_0, window_bounds = array<i64: 8, 256>}, {transform_indices = @transform_1, window_bounds = array<i64: 8, 1>}, {transform_indices = @transform_2, window_bounds = array<i64: 1, 1, 1>}, {transform_indices = @transform_3, window_bounds = array<i64: 1, 1, 1>}]} {
    %c0_i32 = arith.constant 0 : i32
    %0 = arith.cmpi eq, %arg1, %c0_i32 : i32
    %1 = arith.extui %0 : i1 to i32
    %c0_i32_0 = arith.constant 0 : i32
    %2 = arith.cmpi ne, %1, %c0_i32_0 : i32
    scf.if %2 {
      %cst_22 = arith.constant 0.000000e+00 : f32
      %46 = vector.broadcast %cst_22 : f32 to vector<1x1x1xf32>
      %c0_23 = arith.constant 0 : index
      %c0_24 = arith.constant 0 : index
      %c0_25 = arith.constant 0 : index
      %47 = vector.load %arg4[%c0_23, %c0_24, %c0_25] : memref<1x1x1xf32, #tpu.memory_space<vmem>>, vector<1x1x1xf32>
      tpu.vector_store %arg4[%c0_23, %c0_24, %c0_25], %46 {strides = array<i32>} : memref<1x1x1xf32, #tpu.memory_space<vmem>>, vector<1x1x1xf32>,
      %cst_26 = arith.constant 0.000000e+00 : f32
      %48 = vector.broadcast %cst_26 : f32 to vector<1x1x1xf32>
      %c0_27 = arith.constant 0 : index
      %c0_28 = arith.constant 0 : index
      %c0_29 = arith.constant 0 : index
      %49 = vector.load %arg5[%c0_27, %c0_28, %c0_29] : memref<1x1x1xf32, #tpu.memory_space<vmem>>, vector<1x1x1xf32>
      tpu.vector_store %arg5[%c0_27, %c0_28, %c0_29], %48 {strides = array<i32>} : memref<1x1x1xf32, #tpu.memory_space<vmem>>, vector<1x1x1xf32>,
    } else {
    }
    %c0 = arith.constant 0 : index
    %c0_1 = arith.constant 0 : index
    %3 = vector.load %arg2[%c0, %c0_1] : memref<8x256xf32, #tpu.memory_space<vmem>>, vector<8x256xf32>
    %c0_2 = arith.constant 0 : index
    %c0_3 = arith.constant 0 : index
    %4 = vector.load %arg3[%c0_2, %c0_3] : memref<8x1xi32, #tpu.memory_space<vmem>>, vector<8x1xi32>
    %5 = tpu.iota {dimensions = array<i32: 1>} : vector<1x256xi32>
    %6 = vector.broadcast %5 : vector<1x256xi32> to vector<8x256xi32>
    %7 = vector.broadcast %4 : vector<8x1xi32> to vector<8x256xi32>
    %8 = arith.cmpi eq, %6, %7 : vector<8x256xi32>
    %cst = arith.constant dense<0xFF800000> : vector<8xf32>
    %9 = vector.multi_reduction <maximumf>, %3, %cst [1] : vector<8x256xf32> to vector<8xf32>
    %10 = vector.shape_cast %9 : vector<8xf32> to vector<8x1xf32>
    %11 = vector.broadcast %10 : vector<8x1xf32> to vector<8x256xf32>
    %12 = arith.subf %3, %11 : vector<8x256xf32>
    %13 = math.exp %12 : vector<8x256xf32>
    %cst_4 = arith.constant dense<0.000000e+00> : vector<8xf32>
    %14 = vector.multi_reduction <add>, %13, %cst_4 [1] : vector<8x256xf32> to vector<8xf32>
    %15 = vector.shape_cast %14 : vector<8xf32> to vector<8x1xf32>
    %16 = math.log %15 : vector<8x1xf32>
    %17 = arith.addf %10, %16 : vector<8x1xf32>
    %cst_5 = arith.constant 0.000000e+00 : f32
    %18 = vector.broadcast %cst_5 : f32 to vector<8x256xf32>
    %19 = arith.select %8, %3, %18 : vector<8x256xi1>, vector<8x256xf32>
    %cst_6 = arith.constant dense<0.000000e+00> : vector<8xf32>
    %20 = vector.multi_reduction <add>, %19, %cst_6 [1] : vector<8x256xf32> to vector<8xf32>
    %21 = vector.shape_cast %20 : vector<8xf32> to vector<8x1xf32>
    %22 = arith.subf %17, %21 : vector<8x1xf32>
    %23 = vector.broadcast %10 : vector<8x1xf32> to vector<8x256xf32>
    %24 = arith.cmpf oeq, %3, %23 : vector<8x256xf32>
    %c256_i32 = arith.constant 256 : i32
    %25 = vector.shape_cast %5 : vector<1x256xi32> to vector<1x256xi32>
    %26 = vector.broadcast %25 : vector<1x256xi32> to vector<8x256xi32>
    %27 = vector.broadcast %c256_i32 : i32 to vector<8x256xi32>
    %28 = arith.select %24, %26, %27 : vector<8x256xi1>, vector<8x256xi32>
    %cst_7 = arith.constant dense<2147483647> : vector<8xi32>
    %29 = vector.multi_reduction <minsi>, %28, %cst_7 [1] : vector<8x256xi32> to vector<8xi32>
    %30 = vector.shape_cast %29 : vector<8xi32> to vector<8x1xi32>
    %31 = arith.cmpi eq, %30, %4 : vector<8x1xi32>
    %32 = arith.extui %31 : vector<8x1xi1> to vector<8x1xi32>
    %33 = arith.sitofp %32 : vector<8x1xi32> to vector<8x1xf32>
    %c0_8 = arith.constant 0 : index
    %c0_9 = arith.constant 0 : index
    %c0_10 = arith.constant 0 : index
    %34 = vector.load %arg4[%c0_8, %c0_9, %c0_10] : memref<1x1x1xf32, #tpu.memory_space<vmem>>, vector<1x1x1xf32>
    %cst_11 = arith.constant dense<0.000000e+00> : vector<1xf32>
    %35 = vector.multi_reduction <add>, %22, %cst_11 [0] : vector<8x1xf32> to vector<1xf32>
    %36 = vector.shape_cast %35 : vector<1xf32> to vector<1x1xf32>
    %37 = vector.shape_cast %36 : vector<1x1xf32> to vector<1x1x1xf32>
    %38 = arith.addf %34, %37 : vector<1x1x1xf32>
    %c0_12 = arith.constant 0 : index
    %c0_13 = arith.constant 0 : index
    %c0_14 = arith.constant 0 : index
    %39 = vector.load %arg4[%c0_12, %c0_13, %c0_14] : memref<1x1x1xf32, #tpu.memory_space<vmem>>, vector<1x1x1xf32>
    tpu.vector_store %arg4[%c0_12, %c0_13, %c0_14], %38 {strides = array<i32>} : memref<1x1x1xf32, #tpu.memory_space<vmem>>, vector<1x1x1xf32>,
    %c0_15 = arith.constant 0 : index
    %c0_16 = arith.constant 0 : index
    %c0_17 = arith.constant 0 : index
    %40 = vector.load %arg5[%c0_15, %c0_16, %c0_17] : memref<1x1x1xf32, #tpu.memory_space<vmem>>, vector<1x1x1xf32>
    %cst_18 = arith.constant dense<0.000000e+00> : vector<1xf32>
    %41 = vector.multi_reduction <add>, %33, %cst_18 [0] : vector<8x1xf32> to vector<1xf32>
    %42 = vector.shape_cast %41 : vector<1xf32> to vector<1x1xf32>
    %43 = vector.shape_cast %42 : vector<1x1xf32> to vector<1x1x1xf32>
    %44 = arith.addf %40, %43 : vector<1x1x1xf32>
    %c0_19 = arith.constant 0 : index
    %c0_20 = arith.constant 0 : index
    %c0_21 = arith.constant 0 : index
    %45 = vector.load %arg5[%c0_19, %c0_20, %c0_21] : memref<1x1x1xf32, #tpu.memory_space<vmem>>, vector<1x1x1xf32>
    tpu.vector_store %arg5[%c0_19, %c0_20, %c0_21], %44 {strides = array<i32>} : memref<1x1x1xf32, #tpu.memory_space<vmem>>, vector<1x1x1xf32>,
    return
  }
  func.func @transform_0(%arg0: i32, %arg1: i32) -> (i32, i32) {
    %c1_i32 = arith.constant 1 : i32
    %0 = arith.muli %arg0, %c1_i32 : i32
    %1 = arith.addi %0, %arg1 : i32
    %c0_i32 = arith.constant 0 : i32
    %2 = arith.minsi %1, %c0_i32 : i32
    %c0_i32_0 = arith.constant 0 : i32
    %c0_i32_1 = arith.constant 0 : i32
    return %2, %c0_i32_0 : i32, i32
  }
  func.func @transform_1(%arg0: i32, %arg1: i32) -> (i32, i32) {
    %c1_i32 = arith.constant 1 : i32
    %0 = arith.muli %arg0, %c1_i32 : i32
    %1 = arith.addi %0, %arg1 : i32
    %c0_i32 = arith.constant 0 : i32
    %2 = arith.minsi %1, %c0_i32 : i32
    %c0_i32_0 = arith.constant 0 : i32
    %c0_i32_1 = arith.constant 0 : i32
    return %2, %c0_i32_0 : i32, i32
  }
  func.func @transform_2(%arg0: i32, %arg1: i32) -> (i32, i32, i32) {
    %c0_i32 = arith.constant 0 : i32
    %c0_i32_0 = arith.constant 0 : i32
    %c0_i32_1 = arith.constant 0 : i32
    return %arg0, %c0_i32, %c0_i32_0 : i32, i32, i32
  }
  func.func @transform_3(%arg0: i32, %arg1: i32) -> (i32, i32, i32) {
    %c0_i32 = arith.constant 0 : i32
    %c0_i32_0 = arith.constant 0 : i32
    %c0_i32_1 = arith.constant 0 : i32
    return %arg0, %c0_i32, %c0_i32_0 : i32, i32, i32
  }
}

</mosaic_0001>

<llo_original>
// kernel: tpu_custom_call.1
$region0: #{tpu_custom_call.1}
  #allocation0 [shape = 'u32[]', space=smem, size = 0x4, offset = 0x4, fixed_abs, tag = 'smem constant byte address 0x4 - core index']
  #allocation1 [shape = 'u32[72,128]{1,0:T(1,128)}', space=vmem, size = 0x9000, scoped, tag = 'internal scratch']
  %s0 = inlined_call_operand.hbm [shape: f32[8,256], index: 0, kind: input, shape index: {}]
  %s1 = inlined_call_operand.vmem [shape: s32[8,1], index: 1, kind: input, shape index: {}]
  %s2 = inlined_call_operand.hbm [shape: f32[1,1,1], index: 2, kind: output, shape index: {0}]
  %s3 = inlined_call_operand.hbm [shape: f32[1,1,1], index: 3, kind: output, shape index: {1}]
  %4 = xla_tuple %s2, %s3
  %s5 = sld [smem:[#allocation0]]
  $region34: #{tpu_custom_call.1} parent=0
    _
  %s7 = ssub.s32 1, %s5
  %s8 = scalar_select 0, %s7, %s5
  $region1: #{tpu_custom_call.1} parent=0
    #allocation2 [shape = 'u8[8192]{0}', space=vmem, size = 0x2000, scoped, tag = 'input window, operand 0, single buffered']
    #allocation3 [shape = 's32[1]{0}', space=sflag, size = 0x4, scoped, tag = 'scoped memory for tpu_custom_call.1']
    #allocation4 [shape = 's32[1]{0}', space=sflag, size = 0x4, scoped, tag = 'scoped memory for tpu_custom_call.1']
    #allocation5 [shape = 'u8[512]{0}', space=vmem, size = 0x400, scoped, tag = 'output window, operand 0, single buffered']
    #allocation6 [shape = 'u8[512]{0}', space=vmem, size = 0x400, scoped, tag = 'output window, operand 1, single buffered']
    #allocation7 [shape = 's32[1]{0}', space=sflag, size = 0x4, scoped, tag = 'scoped memory for tpu_custom_call.1']
    %9 = vsyncpa [#allocation3], 0
    %10 = vsyncpa [#allocation4], 0
    %11 = vsyncpa [#allocation7], 0
    // Predicated region
    $region2: #{tpu_custom_call.1} parent=1 // pred_check
      _
    $region3: #{tpu_custom_call.1} parent=1 // pred_check_branch
      %13 = sbr.rel (0) target = $region5
    $region4: #{tpu_custom_call.1} parent=1 // pred_region
      %s14 = sadd.s32 0, 0
      %p15 = scmp.lt.s32.totalorder %s14, 0
      %s16 = scalar_select %p15, %s14, 0
      %18 = vsyncadd [#allocation3], 0
      %s19 = smul.addr %s16, 2
      %s20 = smul.addr %s19, 8
      %s21 = scalar_lea.hbm %s0, %s20
      %s23 = sshll.u32 %s21, 4
      %s24 = int_to_ptr.hbm [resolvable:$true] %s23
      %s25 = sshll.u32 [#allocation2], 4
      %s26 = int_to_ptr.vmem [resolvable:$true] %s25
      %28 = dma.hbm_to_vmem [thread:$0]  %s24, 256, %s26, [#allocation3]
    $region5: #{tpu_custom_call.1} parent=1 // pred_fallthru
      _
    // Predicated region
    $region6: #{tpu_custom_call.1} parent=1 // pred_check
      _
    $region7: #{tpu_custom_call.1} parent=1 // pred_check_branch
      %30 = sbr.rel (0) target = $region9
    $region8: #{tpu_custom_call.1} parent=1 // pred_region
      %s31 = sadd.s32 0, 0
      %p32 = scmp.lt.s32.totalorder %s31, 0
      %s33 = scalar_select %p32, %s31, 0
      %p34 = scmp.lt.s32.totalorder %s33, 0
      %s35 = scalar_select %p34, %s33, 0
      %s36 = smul.addr %s35, 8
      %s37 = scalar_lea.vmem %s1, %s36
      %s38 = sadd.s32 0, 0
      %p39 = scmp.lt.s32.totalorder %s38, 0
      %s40 = scalar_select %p39, %s38, 0
    $region9: #{tpu_custom_call.1} parent=1 // pred_fallthru
      _
    // Predicated region
    $region10: #{tpu_custom_call.1} parent=1 // pred_check
      _
    $region11: #{tpu_custom_call.1} parent=1 // pred_check_branch
      %42 = sbr.rel (0) target = $region13
    $region12: #{tpu_custom_call.1} parent=1 // pred_region
      %44 = dma.done [#allocation3], 256
    $region13: #{tpu_custom_call.1} parent=1 // pred_fallthru
      _
    %s45 = sadd.s32 0, 0
    %p46 = scmp.lt.s32.totalorder %s45, 0
    %s47 = scalar_select %p46, %s45, 0
    %p48 = scmp.lt.s32.totalorder %s47, 0
    %s49 = scalar_select %p48, %s47, 0
    %s50 = smul.addr %s49, 8
    %s51 = scalar_lea.vmem %s1, %s50
    %s52 = sadd.s32 0, 0
    %p53 = scmp.lt.s32.totalorder %s52, 0
    %s54 = scalar_select %p53, %s52, 0
    %s55 = sadd.s32 0, 0
    %p56 = scmp.lt.s32.totalorder %s55, 0
    %s57 = scalar_select %p56, %s55, 0
    %p58 = scmp.lt.s32.totalorder %s57, 0
    %s59 = scalar_select %p58, %s57, 0
    %s60 = smul.addr %s59, 8
    %s61 = scalar_lea.vmem %s1, %s60
    %s62 = sadd.s32 0, 0
    %p63 = scmp.lt.s32.totalorder %s62, 0
    %s64 = scalar_select %p63, %s62, 0
    %p65 = scmp.eq.s32.totalorder 0, 0
    // Predicated region
    $region14: #{tpu_custom_call.1} parent=1 // pred_check
      %p66 = pneg %p65
    $region15: #{tpu_custom_call.1} parent=1 // pred_check_branch
      %68 = sbr.rel (%p66) target = $region17
    $region16: #{tpu_custom_call.1} parent=1 // pred_region
      %vm69 = vcmask 0
      %70 = vst.msk [vmem:[#allocation5] sm:$0x1] %vm69, 0.0
      %71 = vst.msk [vmem:[#allocation6] sm:$0x1] %vm69, 0.0
    $region17: #{tpu_custom_call.1} parent=1 // pred_fallthru
      _
    %v72 = vld [vmem:[#allocation2] sm:$0xff]
    %v73 = vld [vmem:[#allocation2 + $0x8] sm:$0xff]
    %v74 = vld [vmem:[%s61] sm:$0xff]
    %v75 = vlaneseq
    %v76 = vand.u32 %v75, 127
    %v77 = vadd.s32 %v76, 128
    %78 = vset.pattern.permute.xlu0 0
    %79 = vperm.xlu0 %78, %v74
    %v80 = vpop.permute.xlu0 %79
    %vm81 = vcmp.eq.s32.totalorder %v76, %v80
    %vm82 = vcmp.eq.s32.totalorder %v77, %v80
    %v83 = vmax.f32 %v72, %v73
    %84 = vmax.xlane.f32.xlu0 %v83
    %v85 = vpop.xlane.xlu0 %84
    %v86 = vsub.f32 %v72, %v85
    %v87 = vsub.f32 %v73, %v85
    %v88 = vmul.f32 %v86, 1.442695
    %v89 = vpow.pop %v88
    %v90 = vmul.f32 %v87, 1.442695
    %v91 = vpow.pop %v90
    %v92 = vadd.f32 %v89, %v91
    %93 = vadd.xlane.f32.xlu0 %v92
    %v94 = vpop.xlane.xlu0 %93
    %v95 = vlog2.pop %v94
    %v96 = vmul.f32 %v95, 0.6931472
    %v97 = vadd.f32 %v85, %v96
    %v98 = vsel %vm81, %v72, 0.0
    %v99 = vsel %vm82, %v73, 0.0
    %v100 = vadd.f32 %v98, %v99
    %101 = vadd.xlane.f32.xlu0 %v100
    %v102 = vpop.xlane.xlu0 %101
    %v103 = vsub.f32 %v97, %v102
    %vm104 = vcmp.eq.f32.partialorder %v72, %v85
    %vm105 = vcmp.eq.f32.partialorder %v73, %v85
    %v106 = vsel %vm104, %v76, 256
    %v107 = vsel %vm105, %v77, 256
    %vm108 = vcmp.lt.s32.totalorder %v106, %v107
    %v109 = vsel %vm108, %v106, %v107
    %v110 = vand.u32 %v109, 65535
    %v111 = vshra.s32 %v109, 16
    %v112 = vcvt.s32.f32 %v110
    %v113 = vcvt.s32.f32 %v111
    %114 = vmin.xlane.f32.xlu0 %v113
    %v115 = vpop.xlane.xlu0 %114
    %vm116 = vcmp.eq.f32.partialorder %v113, %v115
    %v117 = vsel %vm116, %v112, inf
    %118 = vmin.xlane.f32.xlu0 %v117
    %v119 = vpop.xlane.xlu0 %118
    %v120 = vcvt.f32.s32 %v119
    %v121 = vcvt.f32.s32 %v115
    %v122 = vshll.u32 %v121, 16
    %v123 = vadd.s32 %v122, %v120
    %vm124 = vcmp.eq.s32.totalorder %v123, %v74
    %v125 = vsel %vm124, 1, 0
    %v126 = vcvt.s32.f32 %v125
    %v127 = vld [vmem:[#allocation5] sm:$0x1]
    %v128 = vrot.slane %v103, 4
    %v129 = vadd.f32 %v103, %v128
    %v130 = vrot.slane %v129, 2
    %v131 = vadd.f32 %v129, %v130
    %v132 = vrot.slane %v131, 1
    %v133 = vadd.f32 %v131, %v132
    %v134 = vadd.f32 %v127, %v133
    %vm135 = vcmask 0
    %136 = vst.msk [vmem:[#allocation5] sm:$0x1] %vm135, %v134
    %v137 = vld [vmem:[#allocation6] sm:$0x1]
    %vm138 = vcmask 7168
    %v139 = vsel %vm138, %v126, 0.0
    %v140 = vrot.slane %v139, 4
    %v141 = vadd.f32 %v139, %v140
    %v142 = vrot.slane %v141, 2
    %v143 = vadd.f32 %v141, %v142
    %v144 = vrot.slane %v143, 1
    %v145 = vadd.f32 %v143, %v144
    %v146 = vadd.f32 %v137, %v145
    %147 = vst.msk [vmem:[#allocation6] sm:$0x1] %vm135, %v146
    // Predicated region
    $region18: #{tpu_custom_call.1} parent=1 // pred_check
      _
    $region19: #{tpu_custom_call.1} parent=1 // pred_check_branch
      %149 = sbr.rel (0) target = $region21
    $region20: #{tpu_custom_call.1} parent=1 // pred_region
      %151 = vsyncadd [#allocation4], 0
      %s153 = sshll.u32 [#allocation5], 4
      %s154 = int_to_ptr.vmem [resolvable:$true] %s153
      %s155 = sshll.u32 %s2, 4
      %s156 = int_to_ptr.hbm [resolvable:$true] %s155
      %158 = dma.vmem_to_hbm [thread:$0]  %s154, 16, %s156, [#allocation4]
    $region21: #{tpu_custom_call.1} parent=1 // pred_fallthru
      _
    // Predicated region
    $region22: #{tpu_custom_call.1} parent=1 // pred_check
      _
    $region23: #{tpu_custom_call.1} parent=1 // pred_check_branch
      %160 = sbr.rel (0) target = $region25
    $region24: #{tpu_custom_call.1} parent=1 // pred_region
      %162 = vsyncadd [#allocation7], 0
      %s164 = sshll.u32 [#allocation6], 4
      %s165 = int_to_ptr.vmem [resolvable:$true] %s164
      %s166 = sshll.u32 %s3, 4
      %s167 = int_to_ptr.hbm [resolvable:$true] %s166
      %169 = dma.vmem_to_hbm [thread:$0]  %s165, 16, %s167, [#allocation7]
    $region25: #{tpu_custom_call.1} parent=1 // pred_fallthru
      _
    // Predicated region
    $region26: #{tpu_custom_call.1} parent=1 // pred_check
      _
    $region27: #{tpu_custom_call.1} parent=1 // pred_check_branch
      %171 = sbr.rel (0) target = $region29
    $region28: #{tpu_custom_call.1} parent=1 // pred_region
      %173 = dma.done [#allocation4], 16
    $region29: #{tpu_custom_call.1} parent=1 // pred_fallthru
      _
    // Predicated region
    $region30: #{tpu_custom_call.1} parent=1 // pred_check
      _
    $region31: #{tpu_custom_call.1} parent=1 // pred_check_branch
      %175 = sbr.rel (0) target = $region33
    $region32: #{tpu_custom_call.1} parent=1 // pred_region
      %177 = dma.done [#allocation7], 16
    $region33: #{tpu_custom_call.1} parent=1 // pred_fallthru
      _
    %178 = vsyncpa [#allocation3], 1
    %179 = vsyncpa [#allocation4], 1
    %180 = vsyncpa [#allocation7], 1

</llo_original>
